<compile_context>
chip_gen: v5e
topology: v5e:2x2
jax: 0.10.0
libtpu: 0.0.40
codegen_flags: <defaults>
</compile_context>

<pallas_src>
import functools

import jax
import jax.numpy as jnp
from jax.experimental import pallas as pl
from jax.experimental.pallas import tpu as pltpu


def _vq_kernel(xt_ref, a_ref, embt_ref,
               qt_ref, idx_ref, sse_ref, cnt_ref,
               *, m_total, needs_mask):
    """One tile of tm rows; everything in transposed (feature-major) layout.

    xt_ref:   (D+1, tm) input rows on the lane axis; last row is all ones
              (bias column for the augmented score matmul).
    a_ref:    (K, D+1)  augmented codebook  [-E | 0.5*||e_k||^2].
    embt_ref: (D, K)    codebook transposed (for the one-hot lookup matmul).
    qt_ref:   (D, tm)   quantized rows (lane-dense stores).
    idx_ref:  (1, tm)   int32 argmin codebook indices (== K for padded cols).
    sse_ref:  (1, 1)    this tile's partial sum((quantized - input)^2).
    cnt_ref:  (K, 1)    this tile's partial per-code counts.
    """
    i = pl.program_id(0)

    xt_aug = xt_ref[...].astype(jnp.float32)     # (D+1, tm)
    a = a_ref[...]                               # (K, D+1) f32
    emb_t = embt_ref[...].astype(jnp.float32)    # (D, K)

    K = a.shape[0]
    D = emb_t.shape[0]
    tm = xt_aug.shape[1]

    # score[k, m] = 0.5*||e_k||^2 - x_m . e_k  (argmin-equivalent to the full
    # squared distance; ||x||^2 is constant per row and dropped).  Bias folded
    # into the augmented codebook -> one MXU matmul, no VPU loop.
    score = jnp.dot(a, xt_aug, preferred_element_type=jnp.float32)    # (K, tm)

    min_s = jnp.min(score, axis=0, keepdims=True)                     # (1, tm)
    iota_k = jax.lax.broadcasted_iota(jnp.int32, score.shape, 0)
    # first-occurrence tie-break, matching torch.argmin
    idx = jnp.min(jnp.where(score == min_s, iota_k, K), axis=0, keepdims=True)

    if needs_mask:
        # Padded tail columns: force idx out of range so their one-hot column
        # is all zeros.  Combined with the zero-padded input this gives exactly
        # zero contribution to quant / SSE / counts — masking is ~free.
        col = jax.lax.broadcasted_iota(jnp.int32, idx.shape, 1) + i * tm
        idx = jnp.where(col < m_total, idx, K)

    enc_t = (iota_k == idx).astype(jnp.float32)                       # (K, tm)

    # quant[d, m] = emb[idx[m], d]: MXU matmul over K, lane-dense output.
    quant_t = jnp.dot(emb_t, enc_t, preferred_element_type=jnp.float32)  # (D, tm)

    qt_ref[...] = quant_t.astype(qt_ref.dtype)
    idx_ref[...] = idx

    # Per-tile partial statistics (reduced in the wrapper) — no cross-tile
    # state, so the grid axis stays "parallel" (both v7x TensorCores usable).
    diff = quant_t - xt_aug[:D, :]
    sse_ref[...] = jnp.sum(diff * diff, keepdims=True)                # (1, 1)
    cnt_ref[...] = jnp.sum(enc_t, axis=1, keepdims=True)              # (K, 1)


def _round_up(x, m):
    return ((x + m - 1) // m) * m


def vector_quantizer_forward(x_nchw, embedding, commitment_cost, *, tm_max=8192):
    """Pallas implementation of VectorQuantizer.forward (forward values only).

    Returns (loss, quantized_nchw, perplexity, encodings) like the PyTorch module.
    """
    N, C, H, W = x_nchw.shape
    D = C
    K, D2 = embedding.shape
    assert D2 == D
    M = N * H * W

    # Row tile: multiple of 128, as large as allowed (no divisibility demand).
    tm = min(max(128, (tm_max // 128) * 128), _round_up(M, 128))
    grid = pl.cdiv(M, tm)
    m_pad = grid * tm
    needs_mask = (m_pad != M)

    # Layout glue: NCHW -> (D, M) feature-major, columns ordered (n, h, w) to
    # match the module's NHWC flatten; pad columns to the tile grid and append
    # the all-ones bias row for the augmented score matmul.
    xt = jnp.reshape(jnp.transpose(x_nchw, (1, 0, 2, 3)), (D, M)).astype(jnp.float32)
    if needs_mask:
        xt = jnp.pad(xt, ((0, 0), (0, m_pad - M)))
    xt_aug = jnp.concatenate([xt, jnp.ones((1, m_pad), jnp.float32)], axis=0)

    emb = embedding.astype(jnp.float32)
    # Augmented codebook: score = A @ [x; 1] = 0.5*||e||^2 - x.e
    a = jnp.concatenate(
        [-emb, 0.5 * jnp.sum(emb * emb, axis=1, keepdims=True)], axis=1)  # (K, D+1)
    emb_t = jnp.transpose(emb)                                            # (D, K)

    kernel = functools.partial(_vq_kernel, m_total=M, needs_mask=needs_mask)

    out_shape = (
        jax.ShapeDtypeStruct((D, m_pad), jnp.float32),    # quantized (transposed)
        jax.ShapeDtypeStruct((1, m_pad), jnp.int32),      # argmin indices
        jax.ShapeDtypeStruct((grid, 1, 1), jnp.float32),  # per-tile SSE partials
        jax.ShapeDtypeStruct((grid, K, 1), jnp.float32),  # per-tile code counts
    )

    grid_spec = pltpu.PrefetchScalarGridSpec(
        num_scalar_prefetch=0,
        grid=(grid,),
        in_specs=[
            pl.BlockSpec((D + 1, tm), lambda i: (0, i)),    # augmented input tile
            pl.BlockSpec((K, D + 1), lambda i: (0, 0)),     # augmented codebook
            pl.BlockSpec((D, K), lambda i: (0, 0)),         # codebook^T
        ],
        out_specs=[
            pl.BlockSpec((D, tm), lambda i: (0, i)),        # quantized tile
            pl.BlockSpec((1, tm), lambda i: (0, i)),        # indices tile
            pl.BlockSpec((None, 1, 1), lambda i: (i, 0, 0)),   # SSE partial
            pl.BlockSpec((None, K, 1), lambda i: (i, 0, 0)),   # count partial
        ],
    )

    quant_t, idx, sse_p, cnt_p = pl.pallas_call(
        kernel,
        out_shape=out_shape,
        grid_spec=grid_spec,
        compiler_params=pltpu.CompilerParams(
            # Per-tile partial outputs -> no cross-iteration state -> the row
            # tile axis can be sharded across v7x's two TensorCores.
            dimension_semantics=("parallel",),
            # Each live (K, tm) f32 temp is K*tm*4 bytes (2 MiB at tm=8192);
            # 48 MiB leaves headroom under v7x's 64 MiB physical VMEM.
            vmem_limit_bytes=48 * 1024 * 1024,
        ),
    )(xt_aug, a, emb_t)

    sse = jnp.sum(sse_p)
    counts = jnp.sum(cnt_p[:, :, 0], axis=0)                 # (K,)

    # Forward values: q_latent_loss == e_latent_loss == mse.
    mse = sse / jnp.float32(M * D)
    loss = mse + commitment_cost * mse

    # Straight-through `inputs + (quantized - inputs).detach()` has forward
    # value == quantized.  (D, M_pad) -> NCHW is pure layout glue.
    quant_nchw = jnp.transpose(quant_t[:, :M].reshape(D, N, H, W), (1, 0, 2, 3))

    indices = idx[0, :M]                                     # (M,) int32
    # TODO(synk): callers that only need perplexity/usage should consume
    # `indices`/`counts`; this (M, K) f32 one-hot is materialized only because
    # the PyTorch module returns it, and it dominates end-to-end HBM traffic.
    encodings = jax.nn.one_hot(indices, K, dtype=jnp.float32)

    avg_probs = counts / jnp.float32(M)
    perplexity = jnp.exp(-jnp.sum(avg_probs * jnp.log(avg_probs + 1e-10)))

    return loss, quant_nchw, perplexity, encodings


def _reference_forward(x_nchw, embedding, commitment_cost):
    """Pure-JAX reference mirroring the PyTorch forward (sanity check)."""
    x = jnp.transpose(x_nchw, (0, 2, 3, 1))
    shp = x.shape
    flat = x.reshape(-1, embedding.shape[1])
    dist = (jnp.sum(flat**2, axis=1, keepdims=True)
            + jnp.sum(embedding**2, axis=1)
            - 2.0 * flat @ embedding.T)
    idx = jnp.argmin(dist, axis=1)
    enc = jax.nn.one_hot(idx, embedding.shape[0], dtype=jnp.float32)
    quant = (enc @ embedding).reshape(shp)
    mse = jnp.mean((quant - x) ** 2)
    loss = mse + commitment_cost * mse
    avg = jnp.mean(enc, axis=0)
    perp = jnp.exp(-jnp.sum(avg * jnp.log(avg + 1e-10)))
    return loss, jnp.transpose(quant, (0, 3, 1, 2)), perp, enc


def _check(out, ref, x, embedding, tag):
    """Tie-robust correctness checks.

    Exact distance ties (at float precision) may break differently than
    torch.argmin between the two formulations, so we check *optimality* of the
    selected code and internal consistency rather than bit-identical indices.
    """
    loss, quant, perp, enc = out
    r_loss, _, r_perp, r_enc = ref

    flat = jnp.transpose(x, (0, 2, 3, 1)).reshape(-1, embedding.shape[1])
    dists = (jnp.sum(flat**2, axis=1, keepdims=True)
             + jnp.sum(embedding**2, axis=1)
             - 2.0 * flat @ embedding.T)
    min_d = jnp.min(dists, axis=1)

    assert enc.shape == r_enc.shape, tag
    assert bool(jnp.all(jnp.sum(enc, axis=1) == 1.0)), tag            # one-hot
    my_idx = jnp.argmax(enc, axis=1)
    my_d = jnp.take_along_axis(dists, my_idx[:, None], axis=1)[:, 0]
    assert bool(jnp.all(my_d <= min_d + 1e-5)), tag                    # optimal code

    # Quantized rows must be exactly the selected codebook entries.
    qf = jnp.transpose(quant, (0, 2, 3, 1)).reshape(-1, embedding.shape[1])
    assert bool(jnp.allclose(qf, embedding[my_idx], atol=1e-6)), tag

    assert bool(jnp.allclose(loss, r_loss, atol=1e-5, rtol=1e-4)), tag

    # Perplexity consistent with the returned encodings, and near the reference.
    avg = jnp.mean(enc, axis=0)
    perp_from_enc = jnp.exp(-jnp.sum(avg * jnp.log(avg + 1e-10)))
    assert bool(jnp.allclose(perp, perp_from_enc, atol=1e-3, rtol=1e-4)), tag
    assert bool(jnp.allclose(perp, r_perp, rtol=0.05, atol=0.5)), tag


if __name__ == "__main__":
    num_embeddings = 64
    embedding_dim = 4        # = channel count of the NCHW input
    commitment_cost = 0.25

    key = jax.random.PRNGKey(0)
    k_x1, k_x2, k_e = jax.random.split(key, 3)

    # Deterministic "parameter" init: Embedding.weight ~ U(-1/K, 1/K).
    embedding = jax.random.uniform(
        k_e, (num_embeddings, embedding_dim), dtype=jnp.float32,
        minval=-1.0 / num_embeddings, maxval=1.0 / num_embeddings)

    # Case "aligned": M = 2*16*16 = 512 (tile-aligned rows).
    # Case "ragged":  M = 2*15*15 = 450 (exercises the padded/masked tail tile).
    inputs = {
        "aligned": jax.random.normal(k_x1, (2, embedding_dim, 16, 16), jnp.float32),
        "ragged": jax.random.normal(k_x2, (2, embedding_dim, 15, 15), jnp.float32),
    }

    for name, x in inputs.items():
        ref = _reference_forward(x, embedding, commitment_cost)
        for tm_max in (8192, 128):        # single-tile and multi-tile grids
            tag = f"{name}/tm_max={tm_max}"
            fwd = jax.jit(functools.partial(
                vector_quantizer_forward, commitment_cost=commitment_cost,
                tm_max=tm_max))
            out = fwd(x, embedding)
            jax.block_until_ready(out)
            _check(out, ref, x, embedding, tag)

    print("KERNEL_OK")
</pallas_src>

<mosaic_0001>
module attributes {stable_mosaic.version = 11 : i64} {
  func.func @_vq_kernel(%arg0: i32, %arg1: memref<5x512xf32, #tpu.memory_space<vmem>>, %arg2: memref<64x5xf32, #tpu.memory_space<vmem>>, %arg3: memref<4x64xf32, #tpu.memory_space<vmem>>, %arg4: memref<4x512xf32, #tpu.memory_space<vmem>>, %arg5: memref<1x512xi32, #tpu.memory_space<vmem>>, %arg6: memref<1x1x1xf32, #tpu.memory_space<vmem>>, %arg7: memref<1x64x1xf32, #tpu.memory_space<vmem>>) attributes {dimension_semantics = [#tpu.dimension_semantics<parallel>], iteration_bounds = array<i64: 1>, scalar_prefetch = 0 : i64, scratch_operands = 0 : i64, tpu.core_type = #tpu.core_type<tc>, window_params = [{transform_indices = @transform_0, window_bounds = array<i64: 5, 512>}, {pipeline_mode = #tpu.pipeline_mode<synchronous>, transform_indices = @transform_1, window_bounds = array<i64: 64, 5>}, {pipeline_mode = #tpu.pipeline_mode<synchronous>, transform_indices = @transform_2, window_bounds = array<i64: 4, 64>}, {transform_indices = @transform_3, window_bounds = array<i64: 4, 512>}, {transform_indices = @transform_4, window_bounds = array<i64: 1, 512>}, {transform_indices = @transform_5, window_bounds = array<i64: 1, 1, 1>}, {transform_indices = @transform_6, window_bounds = array<i64: 1, 64, 1>}]} {
    %c0 = arith.constant 0 : index
    %c0_0 = arith.constant 0 : index
    %0 = vector.load %arg1[%c0, %c0_0] : memref<5x512xf32, #tpu.memory_space<vmem>>, vector<5x512xf32>
    %c0_1 = arith.constant 0 : index
    %c0_2 = arith.constant 0 : index
    %1 = vector.load %arg2[%c0_1, %c0_2] : memref<64x5xf32, #tpu.memory_space<vmem>>, vector<64x5xf32>
    %c0_3 = arith.constant 0 : index
    %c0_4 = arith.constant 0 : index
    %2 = vector.load %arg3[%c0_3, %c0_4] : memref<4x64xf32, #tpu.memory_space<vmem>>, vector<4x64xf32>
    %cst = arith.constant dense<0.000000e+00> : vector<64x512xf32>
    %3 = tpu.matmul %1, %0, %cst {dimension_numbers = #tpu.dot_dimension_numbers<[1], [0], [0], [1], [0, 0, 1, 1], [], []>} : vector<64x5xf32>, vector<5x512xf32>, vector<64x512xf32> -> vector<64x512xf32>
    %cst_5 = arith.constant dense<0x7F800000> : vector<512xf32>
    %4 = vector.multi_reduction <minimumf>, %3, %cst_5 [0] : vector<64x512xf32> to vector<512xf32>
    %5 = vector.shape_cast %4 : vector<512xf32> to vector<1x512xf32>
    %6 = tpu.iota {dimensions = array<i32: 0>} : vector<64x512xi32>
    %7 = vector.broadcast %5 : vector<1x512xf32> to vector<64x512xf32>
    %8 = arith.cmpf oeq, %3, %7 : vector<64x512xf32>
    %c64_i32 = arith.constant 64 : i32
    %9 = vector.broadcast %c64_i32 : i32 to vector<64x512xi32>
    %10 = arith.select %8, %6, %9 : vector<64x512xi1>, vector<64x512xi32>
    %cst_6 = arith.constant dense<2147483647> : vector<512xi32>
    %11 = vector.multi_reduction <minsi>, %10, %cst_6 [0] : vector<64x512xi32> to vector<512xi32>
    %12 = vector.shape_cast %11 : vector<512xi32> to vector<1x512xi32>
    %13 = vector.broadcast %12 : vector<1x512xi32> to vector<64x512xi32>
    %14 = arith.cmpi eq, %6, %13 : vector<64x512xi32>
    %15 = arith.extui %14 : vector<64x512xi1> to vector<64x512xi32>
    %16 = arith.sitofp %15 : vector<64x512xi32> to vector<64x512xf32>
    %cst_7 = arith.constant dense<0.000000e+00> : vector<4x512xf32>
    %17 = tpu.matmul %2, %16, %cst_7 {dimension_numbers = #tpu.dot_dimension_numbers<[1], [0], [0], [1], [0, 0, 1, 1], [], []>} : vector<4x64xf32>, vector<64x512xf32>, vector<4x512xf32> -> vector<4x512xf32>
    %c0_8 = arith.constant 0 : index
    %c0_9 = arith.constant 0 : index
    %18 = vector.load %arg4[%c0_8, %c0_9] : memref<4x512xf32, #tpu.memory_space<vmem>>, vector<4x512xf32>
    tpu.vector_store %arg4[%c0_8, %c0_9], %17 {strides = array<i32>} : memref<4x512xf32, #tpu.memory_space<vmem>>, vector<4x512xf32>,
    %c0_10 = arith.constant 0 : index
    %c0_11 = arith.constant 0 : index
    %19 = vector.load %arg5[%c0_10, %c0_11] : memref<1x512xi32, #tpu.memory_space<vmem>>, vector<1x512xi32>
    tpu.vector_store %arg5[%c0_10, %c0_11], %12 {strides = array<i32>} : memref<1x512xi32, #tpu.memory_space<vmem>>, vector<1x512xi32>,
    %20 = vector.extract_strided_slice %0 {offsets = [0, 0], sizes = [4, 512], strides = [1, 1]} : vector<5x512xf32> to vector<4x512xf32>
    %21 = arith.subf %17, %20 : vector<4x512xf32>
    %22 = arith.mulf %21, %21 : vector<4x512xf32>
    %23 = vector.shape_cast %22 : vector<4x512xf32> to vector<1x4x512xf32>
    %cst_12 = arith.constant dense<0.000000e+00> : vector<1xf32>
    %24 = vector.multi_reduction <add>, %23, %cst_12 [1, 2] : vector<1x4x512xf32> to vector<1xf32>
    %25 = vector.shape_cast %24 : vector<1xf32> to vector<1x1x1xf32>
    %26 = vector.extract %25[0, 0, 0] : f32 from vector<1x1x1xf32>
    %27 = vector.broadcast %26 : f32 to vector<1x1xf32>
    %c0_13 = arith.constant 0 : index
    %c0_14 = arith.constant 0 : index
    %c0_15 = arith.constant 0 : index
    %28 = vector.load %arg6[%c0_13, %c0_14, %c0_15] : memref<1x1x1xf32, #tpu.memory_space<vmem>>, vector<1x1x1xf32>
    %29 = vector.shape_cast %28 : vector<1x1x1xf32> to vector<1x1xf32>
    %30 = vector.shape_cast %27 : vector<1x1xf32> to vector<1x1x1xf32>
    tpu.vector_store %arg6[%c0_13, %c0_14, %c0_15], %30 {strides = array<i32>} : memref<1x1x1xf32, #tpu.memory_space<vmem>>, vector<1x1x1xf32>,
    %cst_16 = arith.constant dense<0.000000e+00> : vector<64xf32>
    %31 = vector.multi_reduction <add>, %16, %cst_16 [1] : vector<64x512xf32> to vector<64xf32>
    %32 = vector.shape_cast %31 : vector<64xf32> to vector<64x1xf32>
    %c0_17 = arith.constant 0 : index
    %c0_18 = arith.constant 0 : index
    %c0_19 = arith.constant 0 : index
    %33 = vector.load %arg7[%c0_17, %c0_18, %c0_19] : memref<1x64x1xf32, #tpu.memory_space<vmem>>, vector<1x64x1xf32>
    %34 = vector.shape_cast %33 : vector<1x64x1xf32> to vector<64x1xf32>
    %35 = vector.shape_cast %32 : vector<64x1xf32> to vector<1x64x1xf32>
    tpu.vector_store %arg7[%c0_17, %c0_18, %c0_19], %35 {strides = array<i32>} : memref<1x64x1xf32, #tpu.memory_space<vmem>>, vector<1x64x1xf32>,
    return
  }
  func.func @transform_0(%arg0: i32) -> (i32, i32) {
    %c0_i32 = arith.constant 0 : i32
    %c0_i32_0 = arith.constant 0 : i32
    return %c0_i32, %arg0 : i32, i32
  }
  func.func @transform_1(%arg0: i32) -> (i32, i32) {
    %c0_i32 = arith.constant 0 : i32
    %c0_i32_0 = arith.constant 0 : i32
    %c0_i32_1 = arith.constant 0 : i32
    return %c0_i32, %c0_i32_0 : i32, i32
  }
  func.func @transform_2(%arg0: i32) -> (i32, i32) {
    %c0_i32 = arith.constant 0 : i32
    %c0_i32_0 = arith.constant 0 : i32
    %c0_i32_1 = arith.constant 0 : i32
    return %c0_i32, %c0_i32_0 : i32, i32
  }
  func.func @transform_3(%arg0: i32) -> (i32, i32) {
    %c0_i32 = arith.constant 0 : i32
    %c0_i32_0 = arith.constant 0 : i32
    return %c0_i32, %arg0 : i32, i32
  }
  func.func @transform_4(%arg0: i32) -> (i32, i32) {
    %c0_i32 = arith.constant 0 : i32
    %c0_i32_0 = arith.constant 0 : i32
    return %c0_i32, %arg0 : i32, i32
  }
  func.func @transform_5(%arg0: i32) -> (i32, i32, i32) {
    %c0_i32 = arith.constant 0 : i32
    %c0_i32_0 = arith.constant 0 : i32
    %c0_i32_1 = arith.constant 0 : i32
    return %arg0, %c0_i32, %c0_i32_0 : i32, i32, i32
  }
  func.func @transform_6(%arg0: i32) -> (i32, i32, i32) {
    %c0_i32 = arith.constant 0 : i32
    %c0_i32_0 = arith.constant 0 : i32
    %c0_i32_1 = arith.constant 0 : i32
    return %arg0, %c0_i32, %c0_i32_0 : i32, i32, i32
  }
}

</mosaic_0001>

<llo_original>
// kernel: vector_quantizer_forward.1
$region0: #{vector_quantizer_forward.1}
  #allocation0 [shape = 'u32[]', space=smem, size = 0x4, offset = 0x4, fixed_abs, tag = 'smem constant byte address 0x4 - core index']
  #allocation1 [shape = 'u32[72,128]{1,0:T(1,128)}', space=vmem, size = 0x9000, scoped, tag = 'internal scratch']
  %s0 = inlined_call_operand.vmem [shape: f32[5,512], index: 0, kind: input, shape index: {}]
  %s1 = inlined_call_operand.vmem [shape: f32[64,5], index: 1, kind: input, shape index: {}]
  %s2 = inlined_call_operand.vmem [shape: f32[4,64], index: 2, kind: input, shape index: {}]
  %s3 = inlined_call_operand.vmem [shape: f32[4,512], index: 3, kind: output, shape index: {0}]
  %s4 = inlined_call_operand.vmem [shape: s32[1,512], index: 4, kind: output, shape index: {1}]
  %s5 = inlined_call_operand.hbm [shape: f32[1,1,1], index: 5, kind: output, shape index: {2}]
  %s6 = inlined_call_operand.vmem [shape: f32[1,64,1], index: 6, kind: output, shape index: {3}]
  %7 = xla_tuple %s3, %s4, %s5, %s6
  %s8 = sld [smem:[#allocation0]]
  $region46: #{vector_quantizer_forward.1} parent=0
    _
  %s10 = ssub.s32 1, %s8
  %s11 = scalar_select 0, %s10, %s8
  $region1: #{vector_quantizer_forward.1} parent=0
    #allocation2 [shape = 'u8[512]{0}', space=vmem, size = 0x400, scoped, tag = 'output window, operand 2, single buffered']
    #allocation3 [shape = 's32[1]{0}', space=sflag, size = 0x4, scoped, tag = 'scoped memory for vector_quantizer_forward.1']
    %12 = vsyncpa [#allocation3], 0
    // Predicated region
    $region2: #{vector_quantizer_forward.1} parent=1 // pred_check
      _
    $region3: #{vector_quantizer_forward.1} parent=1 // pred_check_branch
      %14 = sbr.rel (0) target = $region5
    $region4: #{vector_quantizer_forward.1} parent=1 // pred_region
      _
    $region5: #{vector_quantizer_forward.1} parent=1 // pred_fallthru
      _
    // Predicated region
    $region6: #{vector_quantizer_forward.1} parent=1 // pred_check
      _
    $region7: #{vector_quantizer_forward.1} parent=1 // pred_check_branch
      %16 = sbr.rel (0) target = $region9
    $region8: #{vector_quantizer_forward.1} parent=1 // pred_region
      _
    $region9: #{vector_quantizer_forward.1} parent=1 // pred_fallthru
      _
    // Predicated region
    $region10: #{vector_quantizer_forward.1} parent=1 // pred_check
      _
    $region11: #{vector_quantizer_forward.1} parent=1 // pred_check_branch
      %18 = sbr.rel (0) target = $region13
    $region12: #{vector_quantizer_forward.1} parent=1 // pred_region
      _
    $region13: #{vector_quantizer_forward.1} parent=1 // pred_fallthru
      _
    %v19 = vld [vmem:[%s0] sm:$0x1f]
    %v20 = vld [vmem:[%s0 + $0x8] sm:$0x1f]
    %v21 = vld [vmem:[%s0 + $0x10] sm:$0x1f]
    %v22 = vld [vmem:[%s0 + $0x18] sm:$0x1f]
    %v23 = vld [vmem:[%s1] sm:$0xff]
    %v24 = vld [vmem:[%s1 + $0x8] sm:$0xff]
    %v25 = vld [vmem:[%s1 + $0x10] sm:$0xff]
    %v26 = vld [vmem:[%s1 + $0x18] sm:$0xff]
    %v27 = vld [vmem:[%s1 + $0x20] sm:$0xff]
    %v28 = vld [vmem:[%s1 + $0x28] sm:$0xff]
    %v29 = vld [vmem:[%s1 + $0x30] sm:$0xff]
    %v30 = vld [vmem:[%s1 + $0x38] sm:$0xff]
    %v31 = vld [vmem:[%s2] sm:$0xf]
    %vm32 = vcmask 39936
    %v34 = vsel %vm32, %v23, 0
    %v37 = vsel %vm32, %v24, 0
    %v40 = vsel %vm32, %v25, 0
    %v43 = vsel %vm32, %v26, 0
    %v46 = vsel %vm32, %v27, 0
    %v49 = vsel %vm32, %v28, 0
    %v52 = vsel %vm32, %v29, 0
    %v55 = vsel %vm32, %v30, 0
    %vm57 = vcmask 1044480
    %v59 = vsel %vm57, %v19, 0
    %v62 = vsel %vm57, %v20, 0
    %v65 = vsel %vm57, %v21, 0
    %v68 = vsel %vm57, %v22, 0
    %70 = vmatpush.msra.mxu0 0.0
    %71 = vmatpush.msra.mxu0 0.0
    %72 = vmatpush.msra.mxu0 0.0
    %73 = vmatpush.msra.mxu0 0.0
    %74 = vmatpush.msra.mxu0 0.0
    %75 = vmatpush.msra.mxu0 0.0
    %76 = vmatpush.msra.mxu0 0.0
    %77 = vmatpush.msra.mxu0 0.0
    %78 = vmatpush.msra.mxu0 0.0
    %79 = vmatpush.msra.mxu0 0.0
    %80 = vmatpush.msra.mxu0 0.0
    %81 = vmatpush.msra.mxu0 0.0
    %82 = vmatpush.msra.mxu0 0.0
    %83 = vmatpush.msra.mxu0 0.0
    %84 = vmatpush.msra.mxu0 0.0
    %85 = vmatpush.msra.mxu0 %v59
    %86 = vmatmul.f32.gmra.mxu0 %v34
    %v87 = vpop.f32.mrf.mxu0
    %v88 = vadd.f32 0.0, %v87
    %89 = vmatmul.f32.gmra.mxu0 %v37
    %v90 = vpop.f32.mrf.mxu0
    %v91 = vadd.f32 0.0, %v90
    %92 = vmatmul.f32.gmra.mxu0 %v40
    %v93 = vpop.f32.mrf.mxu0
    %v94 = vadd.f32 0.0, %v93
    %95 = vmatmul.f32.gmra.mxu0 %v43
    %v96 = vpop.f32.mrf.mxu0
    %v97 = vadd.f32 0.0, %v96
    %98 = vmatmul.f32.gmra.mxu0 %v46
    %v99 = vpop.f32.mrf.mxu0
    %v100 = vadd.f32 0.0, %v99
    %101 = vmatmul.f32.gmra.mxu0 %v49
    %v102 = vpop.f32.mrf.mxu0
    %v103 = vadd.f32 0.0, %v102
    %104 = vmatmul.f32.gmra.mxu0 %v52
    %v105 = vpop.f32.mrf.mxu0
    %v106 = vadd.f32 0.0, %v105
    %107 = vmatmul.f32.gmra.mxu0 %v55
    %v108 = vpop.f32.mrf.mxu0
    %v109 = vadd.f32 0.0, %v108
    %110 = vdwg.mxu0
    %111 = vmatpush.msra.mxu0 0.0
    %112 = vmatpush.msra.mxu0 0.0
    %113 = vmatpush.msra.mxu0 0.0
    %114 = vmatpush.msra.mxu0 0.0
    %115 = vmatpush.msra.mxu0 0.0
    %116 = vmatpush.msra.mxu0 0.0
    %117 = vmatpush.msra.mxu0 0.0
    %118 = vmatpush.msra.mxu0 0.0
    %119 = vmatpush.msra.mxu0 0.0
    %120 = vmatpush.msra.mxu0 0.0
    %121 = vmatpush.msra.mxu0 0.0
    %122 = vmatpush.msra.mxu0 0.0
    %123 = vmatpush.msra.mxu0 0.0
    %124 = vmatpush.msra.mxu0 0.0
    %125 = vmatpush.msra.mxu0 0.0
    %126 = vmatpush.msra.mxu0 %v62
    %127 = vmatmul.f32.gmra.mxu0 %v34
    %v128 = vpop.f32.mrf.mxu0
    %v129 = vadd.f32 0.0, %v128
    %130 = vmatmul.f32.gmra.mxu0 %v37
    %v131 = vpop.f32.mrf.mxu0
    %v132 = vadd.f32 0.0, %v131
    %133 = vmatmul.f32.gmra.mxu0 %v40
    %v134 = vpop.f32.mrf.mxu0
    %v135 = vadd.f32 0.0, %v134
    %136 = vmatmul.f32.gmra.mxu0 %v43
    %v137 = vpop.f32.mrf.mxu0
    %v138 = vadd.f32 0.0, %v137
    %139 = vmatmul.f32.gmra.mxu0 %v46
    %v140 = vpop.f32.mrf.mxu0
    %v141 = vadd.f32 0.0, %v140
    %142 = vmatmul.f32.gmra.mxu0 %v49
    %v143 = vpop.f32.mrf.mxu0
    %v144 = vadd.f32 0.0, %v143
    %145 = vmatmul.f32.gmra.mxu0 %v52
    %v146 = vpop.f32.mrf.mxu0
    %v147 = vadd.f32 0.0, %v146
    %148 = vmatmul.f32.gmra.mxu0 %v55
    %v149 = vpop.f32.mrf.mxu0
    %v150 = vadd.f32 0.0, %v149
    %151 = vdwg.mxu0
    %152 = vmatpush.msra.mxu0 0.0
    %153 = vmatpush.msra.mxu0 0.0
    %154 = vmatpush.msra.mxu0 0.0
    %155 = vmatpush.msra.mxu0 0.0
    %156 = vmatpush.msra.mxu0 0.0
    %157 = vmatpush.msra.mxu0 0.0
    %158 = vmatpush.msra.mxu0 0.0
    %159 = vmatpush.msra.mxu0 0.0
    %160 = vmatpush.msra.mxu0 0.0
    %161 = vmatpush.msra.mxu0 0.0
    %162 = vmatpush.msra.mxu0 0.0
    %163 = vmatpush.msra.mxu0 0.0
    %164 = vmatpush.msra.mxu0 0.0
    %165 = vmatpush.msra.mxu0 0.0
    %166 = vmatpush.msra.mxu0 0.0
    %167 = vmatpush.msra.mxu0 %v65
    %168 = vmatmul.f32.gmra.mxu0 %v34
    %v169 = vpop.f32.mrf.mxu0
    %v170 = vadd.f32 0.0, %v169
    %171 = vmatmul.f32.gmra.mxu0 %v37
    %v172 = vpop.f32.mrf.mxu0
    %v173 = vadd.f32 0.0, %v172
    %174 = vmatmul.f32.gmra.mxu0 %v40
    %v175 = vpop.f32.mrf.mxu0
    %v176 = vadd.f32 0.0, %v175
    %177 = vmatmul.f32.gmra.mxu0 %v43
    %v178 = vpop.f32.mrf.mxu0
    %v179 = vadd.f32 0.0, %v178
    %180 = vmatmul.f32.gmra.mxu0 %v46
    %v181 = vpop.f32.mrf.mxu0
    %v182 = vadd.f32 0.0, %v181
    %183 = vmatmul.f32.gmra.mxu0 %v49
    %v184 = vpop.f32.mrf.mxu0
    %v185 = vadd.f32 0.0, %v184
    %186 = vmatmul.f32.gmra.mxu0 %v52
    %v187 = vpop.f32.mrf.mxu0
    %v188 = vadd.f32 0.0, %v187
    %189 = vmatmul.f32.gmra.mxu0 %v55
    %v190 = vpop.f32.mrf.mxu0
    %v191 = vadd.f32 0.0, %v190
    %192 = vdwg.mxu0
    %193 = vmatpush.msra.mxu0 0.0
    %194 = vmatpush.msra.mxu0 0.0
    %195 = vmatpush.msra.mxu0 0.0
    %196 = vmatpush.msra.mxu0 0.0
    %197 = vmatpush.msra.mxu0 0.0
    %198 = vmatpush.msra.mxu0 0.0
    %199 = vmatpush.msra.mxu0 0.0
    %200 = vmatpush.msra.mxu0 0.0
    %201 = vmatpush.msra.mxu0 0.0
    %202 = vmatpush.msra.mxu0 0.0
    %203 = vmatpush.msra.mxu0 0.0
    %204 = vmatpush.msra.mxu0 0.0
    %205 = vmatpush.msra.mxu0 0.0
    %206 = vmatpush.msra.mxu0 0.0
    %207 = vmatpush.msra.mxu0 0.0
    %208 = vmatpush.msra.mxu0 %v68
    %209 = vmatmul.f32.gmra.mxu0 %v34
    %v210 = vpop.f32.mrf.mxu0
    %v211 = vadd.f32 0.0, %v210
    %212 = vmatmul.f32.gmra.mxu0 %v37
    %v213 = vpop.f32.mrf.mxu0
    %v214 = vadd.f32 0.0, %v213
    %215 = vmatmul.f32.gmra.mxu0 %v40
    %v216 = vpop.f32.mrf.mxu0
    %v217 = vadd.f32 0.0, %v216
    %218 = vmatmul.f32.gmra.mxu0 %v43
    %v219 = vpop.f32.mrf.mxu0
    %v220 = vadd.f32 0.0, %v219
    %221 = vmatmul.f32.gmra.mxu0 %v46
    %v222 = vpop.f32.mrf.mxu0
    %v223 = vadd.f32 0.0, %v222
    %224 = vmatmul.f32.gmra.mxu0 %v49
    %v225 = vpop.f32.mrf.mxu0
    %v226 = vadd.f32 0.0, %v225
    %227 = vmatmul.f32.gmra.mxu0 %v52
    %v228 = vpop.f32.mrf.mxu0
    %v229 = vadd.f32 0.0, %v228
    %230 = vmatmul.f32.gmra.mxu0 %v55
    %v231 = vpop.f32.mrf.mxu0
    %v232 = vadd.f32 0.0, %v231
    %233 = vdwg.mxu0
    %v234 = vmin.f32 %v88, %v91
    %v235 = vmin.f32 %v234, %v94
    %v236 = vmin.f32 %v235, %v97
    %v237 = vmin.f32 %v236, %v100
    %v238 = vmin.f32 %v237, %v103
    %v239 = vmin.f32 %v238, %v106
    %v240 = vmin.f32 %v239, %v109
    %v241 = vrot.slane %v240, 4
    %v242 = vmin.f32 %v240, %v241
    %v243 = vrot.slane %v242, 2
    %v244 = vmin.f32 %v242, %v243
    %v245 = vrot.slane %v244, 1
    %v246 = vmin.f32 %v244, %v245
    %v247 = vmin.f32 %v129, %v132
    %v248 = vmin.f32 %v247, %v135
    %v249 = vmin.f32 %v248, %v138
    %v250 = vmin.f32 %v249, %v141
    %v251 = vmin.f32 %v250, %v144
    %v252 = vmin.f32 %v251, %v147
    %v253 = vmin.f32 %v252, %v150
    %v254 = vrot.slane %v253, 4
    %v255 = vmin.f32 %v253, %v254
    %v256 = vrot.slane %v255, 2
    %v257 = vmin.f32 %v255, %v256
    %v258 = vrot.slane %v257, 1
    %v259 = vmin.f32 %v257, %v258
    %v260 = vmin.f32 %v170, %v173
    %v261 = vmin.f32 %v260, %v176
    %v262 = vmin.f32 %v261, %v179
    %v263 = vmin.f32 %v262, %v182
    %v264 = vmin.f32 %v263, %v185
    %v265 = vmin.f32 %v264, %v188
    %v266 = vmin.f32 %v265, %v191
    %v267 = vrot.slane %v266, 4
    %v268 = vmin.f32 %v266, %v267
    %v269 = vrot.slane %v268, 2
    %v270 = vmin.f32 %v268, %v269
    %v271 = vrot.slane %v270, 1
    %v272 = vmin.f32 %v270, %v271
    %v273 = vmin.f32 %v211, %v214
    %v274 = vmin.f32 %v273, %v217
    %v275 = vmin.f32 %v274, %v220
    %v276 = vmin.f32 %v275, %v223
    %v277 = vmin.f32 %v276, %v226
    %v278 = vmin.f32 %v277, %v229
    %v279 = vmin.f32 %v278, %v232
    %v280 = vrot.slane %v279, 4
    %v281 = vmin.f32 %v279, %v280
    %v282 = vrot.slane %v281, 2
    %v283 = vmin.f32 %v281, %v282
    %v284 = vrot.slane %v283, 1
    %v285 = vmin.f32 %v283, %v284
    %v286 = vlaneseq
    %v287 = vshrl.u32 %v286, 7
    %v288 = vadd.s32 %v287, 8
    %v289 = vadd.s32 %v287, 16
    %v290 = vadd.s32 %v287, 24
    %v291 = vadd.s32 %v287, 32
    %v292 = vadd.s32 %v287, 40
    %v293 = vadd.s32 %v287, 48
    %v294 = vadd.s32 %v287, 56
    %vm295 = vcmp.eq.f32.partialorder %v88, %v246
    %vm296 = vcmp.eq.f32.partialorder %v129, %v259
    %vm297 = vcmp.eq.f32.partialorder %v170, %v272
    %vm298 = vcmp.eq.f32.partialorder %v211, %v285
    %vm299 = vcmp.eq.f32.partialorder %v91, %v246
    %vm300 = vcmp.eq.f32.partialorder %v132, %v259
    %vm301 = vcmp.eq.f32.partialorder %v173, %v272
    %vm302 = vcmp.eq.f32.partialorder %v214, %v285
    %vm303 = vcmp.eq.f32.partialorder %v94, %v246
    %vm304 = vcmp.eq.f32.partialorder %v135, %v259
    %vm305 = vcmp.eq.f32.partialorder %v176, %v272
    %vm306 = vcmp.eq.f32.partialorder %v217, %v285
    %vm307 = vcmp.eq.f32.partialorder %v97, %v246
    %vm308 = vcmp.eq.f32.partialorder %v138, %v259
    %vm309 = vcmp.eq.f32.partialorder %v179, %v272
    %vm310 = vcmp.eq.f32.partialorder %v220, %v285
    %vm311 = vcmp.eq.f32.partialorder %v100, %v246
    %vm312 = vcmp.eq.f32.partialorder %v141, %v259
    %vm313 = vcmp.eq.f32.partialorder %v182, %v272
    %vm314 = vcmp.eq.f32.partialorder %v223, %v285
    %vm315 = vcmp.eq.f32.partialorder %v103, %v246
    %vm316 = vcmp.eq.f32.partialorder %v144, %v259
    %vm317 = vcmp.eq.f32.partialorder %v185, %v272
    %vm318 = vcmp.eq.f32.partialorder %v226, %v285
    %vm319 = vcmp.eq.f32.partialorder %v106, %v246
    %vm320 = vcmp.eq.f32.partialorder %v147, %v259
    %vm321 = vcmp.eq.f32.partialorder %v188, %v272
    %vm322 = vcmp.eq.f32.partialorder %v229, %v285
    %vm323 = vcmp.eq.f32.partialorder %v109, %v246
    %vm324 = vcmp.eq.f32.partialorder %v150, %v259
    %vm325 = vcmp.eq.f32.partialorder %v191, %v272
    %vm326 = vcmp.eq.f32.partialorder %v232, %v285
    %v327 = vsel %vm295, %v287, 64
    %v328 = vsel %vm296, %v287, 64
    %v329 = vsel %vm297, %v287, 64
    %v330 = vsel %vm298, %v287, 64
    %v331 = vsel %vm299, %v288, 64
    %v332 = vsel %vm300, %v288, 64
    %v333 = vsel %vm301, %v288, 64
    %v334 = vsel %vm302, %v288, 64
    %v335 = vsel %vm303, %v289, 64
    %v336 = vsel %vm304, %v289, 64
    %v337 = vsel %vm305, %v289, 64
    %v338 = vsel %vm306, %v289, 64
    %v339 = vsel %vm307, %v290, 64
    %v340 = vsel %vm308, %v290, 64
    %v341 = vsel %vm309, %v290, 64
    %v342 = vsel %vm310, %v290, 64
    %v343 = vsel %vm311, %v291, 64
    %v344 = vsel %vm312, %v291, 64
    %v345 = vsel %vm313, %v291, 64
    %v346 = vsel %vm314, %v291, 64
    %v347 = vsel %vm315, %v292, 64
    %v348 = vsel %vm316, %v292, 64
    %v349 = vsel %vm317, %v292, 64
    %v350 = vsel %vm318, %v292, 64
    %v351 = vsel %vm319, %v293, 64
    %v352 = vsel %vm320, %v293, 64
    %v353 = vsel %vm321, %v293, 64
    %v354 = vsel %vm322, %v293, 64
    %v355 = vsel %vm323, %v294, 64
    %v356 = vsel %vm324, %v294, 64
    %v357 = vsel %vm325, %v294, 64
    %v358 = vsel %vm326, %v294, 64
    %vm359 = vcmp.lt.s32.totalorder %v327, %v331
    %v360 = vsel %vm359, %v327, %v331
    %vm361 = vcmp.lt.s32.totalorder %v360, %v335
    %v362 = vsel %vm361, %v360, %v335
    %vm363 = vcmp.lt.s32.totalorder %v362, %v339
    %v364 = vsel %vm363, %v362, %v339
    %vm365 = vcmp.lt.s32.totalorder %v364, %v343
    %v366 = vsel %vm365, %v364, %v343
    %vm367 = vcmp.lt.s32.totalorder %v366, %v347
    %v368 = vsel %vm367, %v366, %v347
    %vm369 = vcmp.lt.s32.totalorder %v368, %v351
    %v370 = vsel %vm369, %v368, %v351
    %vm371 = vcmp.lt.s32.totalorder %v370, %v355
    %v372 = vsel %vm371, %v370, %v355
    %v373 = vrot.slane %v372, 4
    %vm374 = vcmp.lt.s32.totalorder %v372, %v373
    %v375 = vsel %vm374, %v372, %v373
    %v376 = vrot.slane %v375, 2
    %vm377 = vcmp.lt.s32.totalorder %v375, %v376
    %v378 = vsel %vm377, %v375, %v376
    %v379 = vrot.slane %v378, 1
    %vm380 = vcmp.lt.s32.totalorder %v378, %v379
    %v381 = vsel %vm380, %v378, %v379
    %vm382 = vcmp.lt.s32.totalorder %v328, %v332
    %v383 = vsel %vm382, %v328, %v332
    %vm384 = vcmp.lt.s32.totalorder %v383, %v336
    %v385 = vsel %vm384, %v383, %v336
    %vm386 = vcmp.lt.s32.totalorder %v385, %v340
    %v387 = vsel %vm386, %v385, %v340
    %vm388 = vcmp.lt.s32.totalorder %v387, %v344
    %v389 = vsel %vm388, %v387, %v344
    %vm390 = vcmp.lt.s32.totalorder %v389, %v348
    %v391 = vsel %vm390, %v389, %v348
    %vm392 = vcmp.lt.s32.totalorder %v391, %v352
    %v393 = vsel %vm392, %v391, %v352
    %vm394 = vcmp.lt.s32.totalorder %v393, %v356
    %v395 = vsel %vm394, %v393, %v356
    %v396 = vrot.slane %v395, 4
    %vm397 = vcmp.lt.s32.totalorder %v395, %v396
    %v398 = vsel %vm397, %v395, %v396
    %v399 = vrot.slane %v398, 2
    %vm400 = vcmp.lt.s32.totalorder %v398, %v399
    %v401 = vsel %vm400, %v398, %v399
    %v402 = vrot.slane %v401, 1
    %vm403 = vcmp.lt.s32.totalorder %v401, %v402
    %v404 = vsel %vm403, %v401, %v402
    %vm405 = vcmp.lt.s32.totalorder %v329, %v333
    %v406 = vsel %vm405, %v329, %v333
    %vm407 = vcmp.lt.s32.totalorder %v406, %v337
    %v408 = vsel %vm407, %v406, %v337
    %vm409 = vcmp.lt.s32.totalorder %v408, %v341
    %v410 = vsel %vm409, %v408, %v341
    %vm411 = vcmp.lt.s32.totalorder %v410, %v345
    %v412 = vsel %vm411, %v410, %v345
    %vm413 = vcmp.lt.s32.totalorder %v412, %v349
    %v414 = vsel %vm413, %v412, %v349
    %vm415 = vcmp.lt.s32.totalorder %v414, %v353
    %v416 = vsel %vm415, %v414, %v353
    %vm417 = vcmp.lt.s32.totalorder %v416, %v357
    %v418 = vsel %vm417, %v416, %v357
    %v419 = vrot.slane %v418, 4
    %vm420 = vcmp.lt.s32.totalorder %v418, %v419
    %v421 = vsel %vm420, %v418, %v419
    %v422 = vrot.slane %v421, 2
    %vm423 = vcmp.lt.s32.totalorder %v421, %v422
    %v424 = vsel %vm423, %v421, %v422
    %v425 = vrot.slane %v424, 1
    %vm426 = vcmp.lt.s32.totalorder %v424, %v425
    %v427 = vsel %vm426, %v424, %v425
    %vm428 = vcmp.lt.s32.totalorder %v330, %v334
    %v429 = vsel %vm428, %v330, %v334
    %vm430 = vcmp.lt.s32.totalorder %v429, %v338
    %v431 = vsel %vm430, %v429, %v338
    %vm432 = vcmp.lt.s32.totalorder %v431, %v342
    %v433 = vsel %vm432, %v431, %v342
    %vm434 = vcmp.lt.s32.totalorder %v433, %v346
    %v435 = vsel %vm434, %v433, %v346
    %vm436 = vcmp.lt.s32.totalorder %v435, %v350
    %v437 = vsel %vm436, %v435, %v350
    %vm438 = vcmp.lt.s32.totalorder %v437, %v354
    %v439 = vsel %vm438, %v437, %v354
    %vm440 = vcmp.lt.s32.totalorder %v439, %v358
    %v441 = vsel %vm440, %v439, %v358
    %v442 = vrot.slane %v441, 4
    %vm443 = vcmp.lt.s32.totalorder %v441, %v442
    %v444 = vsel %vm443, %v441, %v442
    %v445 = vrot.slane %v444, 2
    %vm446 = vcmp.lt.s32.totalorder %v444, %v445
    %v447 = vsel %vm446, %v444, %v445
    %v448 = vrot.slane %v447, 1
    %vm449 = vcmp.lt.s32.totalorder %v447, %v448
    %v450 = vsel %vm449, %v447, %v448
    %vm451 = vcmp.eq.s32.totalorder %v287, %v381
    %vm452 = vcmp.eq.s32.totalorder %v287, %v404
    %vm453 = vcmp.eq.s32.totalorder %v287, %v427
    %vm454 = vcmp.eq.s32.totalorder %v287, %v450
    %vm455 = vcmp.eq.s32.totalorder %v288, %v381
    %vm456 = vcmp.eq.s32.totalorder %v288, %v404
    %vm457 = vcmp.eq.s32.totalorder %v288, %v427
    %vm458 = vcmp.eq.s32.totalorder %v288, %v450
    %vm459 = vcmp.eq.s32.totalorder %v289, %v381
    %vm460 = vcmp.eq.s32.totalorder %v289, %v404
    %vm461 = vcmp.eq.s32.totalorder %v289, %v427
    %vm462 = vcmp.eq.s32.totalorder %v289, %v450
    %vm463 = vcmp.eq.s32.totalorder %v290, %v381
    %vm464 = vcmp.eq.s32.totalorder %v290, %v404
    %vm465 = vcmp.eq.s32.totalorder %v290, %v427
    %vm466 = vcmp.eq.s32.totalorder %v290, %v450
    %vm467 = vcmp.eq.s32.totalorder %v291, %v381
    %vm468 = vcmp.eq.s32.totalorder %v291, %v404
    %vm469 = vcmp.eq.s32.totalorder %v291, %v427
    %vm470 = vcmp.eq.s32.totalorder %v291, %v450
    %vm471 = vcmp.eq.s32.totalorder %v292, %v381
    %vm472 = vcmp.eq.s32.totalorder %v292, %v404
    %vm473 = vcmp.eq.s32.totalorder %v292, %v427
    %vm474 = vcmp.eq.s32.totalorder %v292, %v450
    %vm475 = vcmp.eq.s32.totalorder %v293, %v381
    %vm476 = vcmp.eq.s32.totalorder %v293, %v404
    %vm477 = vcmp.eq.s32.totalorder %v293, %v427
    %vm478 = vcmp.eq.s32.totalorder %v293, %v450
    %vm479 = vcmp.eq.s32.totalorder %v294, %v381
    %vm480 = vcmp.eq.s32.totalorder %v294, %v404
    %vm481 = vcmp.eq.s32.totalorder %v294, %v427
    %vm482 = vcmp.eq.s32.totalorder %v294, %v450
    %v483 = vsel %vm451, 1, 0
    %v484 = vsel %vm452, 1, 0
    %v485 = vsel %vm453, 1, 0
    %v486 = vsel %vm454, 1, 0
    %v487 = vsel %vm455, 1, 0
    %v488 = vsel %vm456, 1, 0
    %v489 = vsel %vm457, 1, 0
    %v490 = vsel %vm458, 1, 0
    %v491 = vsel %vm459, 1, 0
    %v492 = vsel %vm460, 1, 0
    %v493 = vsel %vm461, 1, 0
    %v494 = vsel %vm462, 1, 0
    %v495 = vsel %vm463, 1, 0
    %v496 = vsel %vm464, 1, 0
    %v497 = vsel %vm465, 1, 0
    %v498 = vsel %vm466, 1, 0
    %v499 = vsel %vm467, 1, 0
    %v500 = vsel %vm468, 1, 0
    %v501 = vsel %vm469, 1, 0
    %v502 = vsel %vm470, 1, 0
    %v503 = vsel %vm471, 1, 0
    %v504 = vsel %vm472, 1, 0
    %v505 = vsel %vm473, 1, 0
    %v506 = vsel %vm474, 1, 0
    %v507 = vsel %vm475, 1, 0
    %v508 = vsel %vm476, 1, 0
    %v509 = vsel %vm477, 1, 0
    %v510 = vsel %vm478, 1, 0
    %v511 = vsel %vm479, 1, 0
    %v512 = vsel %vm480, 1, 0
    %v513 = vsel %vm481, 1, 0
    %v514 = vsel %vm482, 1, 0
    %v515 = vcvt.s32.f32 %v483
    %v516 = vcvt.s32.f32 %v484
    %v517 = vcvt.s32.f32 %v485
    %v518 = vcvt.s32.f32 %v486
    %v519 = vcvt.s32.f32 %v487
    %v520 = vcvt.s32.f32 %v488
    %v521 = vcvt.s32.f32 %v489
    %v522 = vcvt.s32.f32 %v490
    %v523 = vcvt.s32.f32 %v491
    %v524 = vcvt.s32.f32 %v492
    %v525 = vcvt.s32.f32 %v493
    %v526 = vcvt.s32.f32 %v494
    %v527 = vcvt.s32.f32 %v495
    %v528 = vcvt.s32.f32 %v496
    %v529 = vcvt.s32.f32 %v497
    %v530 = vcvt.s32.f32 %v498
    %v531 = vcvt.s32.f32 %v499
    %v532 = vcvt.s32.f32 %v500
    %v533 = vcvt.s32.f32 %v501
    %v534 = vcvt.s32.f32 %v502
    %v535 = vcvt.s32.f32 %v503
    %v536 = vcvt.s32.f32 %v504
    %v537 = vcvt.s32.f32 %v505
    %v538 = vcvt.s32.f32 %v506
    %v539 = vcvt.s32.f32 %v507
    %v540 = vcvt.s32.f32 %v508
    %v541 = vcvt.s32.f32 %v509
    %v542 = vcvt.s32.f32 %v510
    %v543 = vcvt.s32.f32 %v511
    %v544 = vcvt.s32.f32 %v512
    %v545 = vcvt.s32.f32 %v513
    %v546 = vcvt.s32.f32 %v514
    %vm547 = vcmask 523264
    %v549 = vsel %vm547, %v31, 0
    %551 = vmatpush.msra.mxu0 0.0
    %552 = vmatpush.msra.mxu0 0.0
    %553 = vmatpush.msra.mxu0 0.0
    %554 = vmatpush.msra.mxu0 0.0
    %555 = vmatpush.msra.mxu0 0.0
    %556 = vmatpush.msra.mxu0 0.0
    %557 = vmatpush.msra.mxu0 0.0
    %558 = vmatpush.msra.mxu0 0.0
    %559 = vmatpush.msra.mxu0 %v543
    %560 = vmatpush.msra.mxu0 %v539
    %561 = vmatpush.msra.mxu0 %v535
    %562 = vmatpush.msra.mxu0 %v531
    %563 = vmatpush.msra.mxu0 %v527
    %564 = vmatpush.msra.mxu0 %v523
    %565 = vmatpush.msra.mxu0 %v519
    %566 = vmatpush.msra.mxu0 %v515
    %567 = vmatmul.f32.gmra.mxu0 %v549
    %v568 = vpop.f32.mrf.mxu0
    %v569 = vadd.f32 0.0, %v568
    %570 = vdwg.mxu0
    %571 = vmatpush.msra.mxu0 0.0
    %572 = vmatpush.msra.mxu0 0.0
    %573 = vmatpush.msra.mxu0 0.0
    %574 = vmatpush.msra.mxu0 0.0
    %575 = vmatpush.msra.mxu0 0.0
    %576 = vmatpush.msra.mxu0 0.0
    %577 = vmatpush.msra.mxu0 0.0
    %578 = vmatpush.msra.mxu0 0.0
    %579 = vmatpush.msra.mxu0 %v544
    %580 = vmatpush.msra.mxu0 %v540
    %581 = vmatpush.msra.mxu0 %v536
    %582 = vmatpush.msra.mxu0 %v532
    %583 = vmatpush.msra.mxu0 %v528
    %584 = vmatpush.msra.mxu0 %v524
    %585 = vmatpush.msra.mxu0 %v520
    %586 = vmatpush.msra.mxu0 %v516
    %587 = vmatmul.f32.gmra.mxu0 %v549
    %v588 = vpop.f32.mrf.mxu0
    %v589 = vadd.f32 0.0, %v588
    %590 = vdwg.mxu0
    %591 = vmatpush.msra.mxu0 0.0
    %592 = vmatpush.msra.mxu0 0.0
    %593 = vmatpush.msra.mxu0 0.0
    %594 = vmatpush.msra.mxu0 0.0
    %595 = vmatpush.msra.mxu0 0.0
    %596 = vmatpush.msra.mxu0 0.0
    %597 = vmatpush.msra.mxu0 0.0
    %598 = vmatpush.msra.mxu0 0.0
    %599 = vmatpush.msra.mxu0 %v545
    %600 = vmatpush.msra.mxu0 %v541
    %601 = vmatpush.msra.mxu0 %v537
    %602 = vmatpush.msra.mxu0 %v533
    %603 = vmatpush.msra.mxu0 %v529
    %604 = vmatpush.msra.mxu0 %v525
    %605 = vmatpush.msra.mxu0 %v521
    %606 = vmatpush.msra.mxu0 %v517
    %607 = vmatmul.f32.gmra.mxu0 %v549
    %v608 = vpop.f32.mrf.mxu0
    %v609 = vadd.f32 0.0, %v608
    %610 = vdwg.mxu0
    %611 = vmatpush.msra.mxu0 0.0
    %612 = vmatpush.msra.mxu0 0.0
    %613 = vmatpush.msra.mxu0 0.0
    %614 = vmatpush.msra.mxu0 0.0
    %615 = vmatpush.msra.mxu0 0.0
    %616 = vmatpush.msra.mxu0 0.0
    %617 = vmatpush.msra.mxu0 0.0
    %618 = vmatpush.msra.mxu0 0.0
    %619 = vmatpush.msra.mxu0 %v546
    %620 = vmatpush.msra.mxu0 %v542
    %621 = vmatpush.msra.mxu0 %v538
    %622 = vmatpush.msra.mxu0 %v534
    %623 = vmatpush.msra.mxu0 %v530
    %624 = vmatpush.msra.mxu0 %v526
    %625 = vmatpush.msra.mxu0 %v522
    %626 = vmatpush.msra.mxu0 %v518
    %627 = vmatmul.f32.gmra.mxu0 %v549
    %v628 = vpop.f32.mrf.mxu0
    %v629 = vadd.f32 0.0, %v628
    %630 = vdwg.mxu0
    %v635 = vrot.slane %v589, 4
    %v636 = vrot.slane %v629, 4
    %vm637 = vcmask 1043456
    %v638 = vsel %vm637, %v569, %v635
    %v639 = vsel %vm637, %v609, %v636
    %642 = vst [vmem:[%s3] sm:$0xff] %v638
    %643 = vst [vmem:[%s3 + $0x8] sm:$0xff] %v639
    %v644 = vrot.slane %v404, 7
    %v645 = vrot.slane %v427, 6
    %v646 = vrot.slane %v450, 5
    %vm647 = vcmask 1040384
    %v648 = vsel %vm647, %v381, %v644
    %vm649 = vcmask 1042434
    %v650 = vsel %vm649, %v645, %v646
    %vm651 = vcmask 1041408
    %v652 = vsel %vm651, %v648, %v650
    %v653 = vlaneseq
    %vm654 = vcmp.ge.s32.totalorder %v653, 0
    %vm655 = vcmp.lt.s32.totalorder %v653, 512
    %vm656 = vmand %vm654, %vm655
    %657 = vst.msk [vmem:[%s4] sm:$0xf] %vm656, %v652
    %v658 = vsub.f32 %v569, %v19
    %v659 = vsub.f32 %v589, %v20
    %v660 = vsub.f32 %v609, %v21
    %v661 = vsub.f32 %v629, %v22
    %v662 = vmul.f32 %v658, %v658
    %v663 = vmul.f32 %v659, %v659
    %v664 = vmul.f32 %v660, %v660
    %v665 = vmul.f32 %v661, %v661
    %v666 = vsel %vm637, %v662, 0.0
    %v667 = vsel %vm637, %v663, 0.0
    %v668 = vadd.f32 %v666, %v667
    %v669 = vsel %vm637, %v664, 0.0
    %v670 = vadd.f32 %v668, %v669
    %v671 = vsel %vm637, %v665, 0.0
    %v672 = vadd.f32 %v670, %v671
    %673 = vadd.xlane.f32.xlu0 %v672
    %v674 = vpop.xlane.xlu0 %673
    %v675 = vrot.slane %v674, 4
    %v676 = vadd.f32 %v674, %v675
    %v677 = vrot.slane %v676, 2
    %v678 = vadd.f32 %v676, %v677
    %v679 = vrot.slane %v678, 1
    %v680 = vadd.f32 %v678, %v679
    %s681 = vtos %v680
    %v682 = vstv %s681
    %vm683 = vcmask 0
    %684 = vst.msk [vmem:[#allocation2] sm:$0x1] %vm683, %v682
    %v685 = vadd.f32 %v515, %v516
    %v686 = vadd.f32 %v685, %v517
    %v687 = vadd.f32 %v686, %v518
    %688 = vadd.xlane.f32.xlu0 %v687
    %v689 = vpop.xlane.xlu0 %688
    %v690 = vadd.f32 %v519, %v520
    %v691 = vadd.f32 %v690, %v521
    %v692 = vadd.f32 %v691, %v522
    %693 = vadd.xlane.f32.xlu0 %v692
    %v694 = vpop.xlane.xlu0 %693
    %v695 = vadd.f32 %v523, %v524
    %v696 = vadd.f32 %v695, %v525
    %v697 = vadd.f32 %v696, %v526
    %698 = vadd.xlane.f32.xlu0 %v697
    %v699 = vpop.xlane.xlu0 %698
    %v700 = vadd.f32 %v527, %v528
    %v701 = vadd.f32 %v700, %v529
    %v702 = vadd.f32 %v701, %v530
    %703 = vadd.xlane.f32.xlu0 %v702
    %v704 = vpop.xlane.xlu0 %703
    %v705 = vadd.f32 %v531, %v532
    %v706 = vadd.f32 %v705, %v533
    %v707 = vadd.f32 %v706, %v534
    %708 = vadd.xlane.f32.xlu0 %v707
    %v709 = vpop.xlane.xlu0 %708
    %v710 = vadd.f32 %v535, %v536
    %v711 = vadd.f32 %v710, %v537
    %v712 = vadd.f32 %v711, %v538
    %713 = vadd.xlane.f32.xlu0 %v712
    %v714 = vpop.xlane.xlu0 %713
    %v715 = vadd.f32 %v539, %v540
    %v716 = vadd.f32 %v715, %v541
    %v717 = vadd.f32 %v716, %v542
    %718 = vadd.xlane.f32.xlu0 %v717
    %v719 = vpop.xlane.xlu0 %718
    %v720 = vadd.f32 %v543, %v544
    %v721 = vadd.f32 %v720, %v545
    %v722 = vadd.f32 %v721, %v546
    %723 = vadd.xlane.f32.xlu0 %v722
    %v724 = vpop.xlane.xlu0 %723
    %vm725 = vcmask 7168
    %726 = vst.msk [vmem:[%s6] sm:$0xff] %vm725, %v689
    %727 = vst.msk [vmem:[%s6 + $0x8] sm:$0xff] %vm725, %v694
    %728 = vst.msk [vmem:[%s6 + $0x10] sm:$0xff] %vm725, %v699
    %729 = vst.msk [vmem:[%s6 + $0x18] sm:$0xff] %vm725, %v704
    %730 = vst.msk [vmem:[%s6 + $0x20] sm:$0xff] %vm725, %v709
    %731 = vst.msk [vmem:[%s6 + $0x28] sm:$0xff] %vm725, %v714
    %732 = vst.msk [vmem:[%s6 + $0x30] sm:$0xff] %vm725, %v719
    %733 = vst.msk [vmem:[%s6 + $0x38] sm:$0xff] %vm725, %v724
    // Predicated region
    $region14: #{vector_quantizer_forward.1} parent=1 // pred_check
      _
    $region15: #{vector_quantizer_forward.1} parent=1 // pred_check_branch
      %735 = sbr.rel (0) target = $region17
    $region16: #{vector_quantizer_forward.1} parent=1 // pred_region
      _
    $region17: #{vector_quantizer_forward.1} parent=1 // pred_fallthru
      _
    // Predicated region
    $region18: #{vector_quantizer_forward.1} parent=1 // pred_check
      _
    $region19: #{vector_quantizer_forward.1} parent=1 // pred_check_branch
      %737 = sbr.rel (0) target = $region21
    $region20: #{vector_quantizer_forward.1} parent=1 // pred_region
      _
    $region21: #{vector_quantizer_forward.1} parent=1 // pred_fallthru
      _
    // Predicated region
    $region22: #{vector_quantizer_forward.1} parent=1 // pred_check
      _
    $region23: #{vector_quantizer_forward.1} parent=1 // pred_check_branch
      %739 = sbr.rel (0) target = $region25
    $region24: #{vector_quantizer_forward.1} parent=1 // pred_region
      %741 = vsyncadd [#allocation3], 0
      %s743 = sshll.u32 [#allocation2], 4
      %s744 = int_to_ptr.vmem [resolvable:$true] %s743
      %s745 = sshll.u32 %s5, 4
      %s746 = int_to_ptr.hbm [resolvable:$true] %s745
      %748 = dma.vmem_to_hbm [thread:$0]  %s744, 16, %s746, [#allocation3]
    $region25: #{vector_quantizer_forward.1} parent=1 // pred_fallthru
      _
    // Predicated region
    $region26: #{vector_quantizer_forward.1} parent=1 // pred_check
      _
    $region27: #{vector_quantizer_forward.1} parent=1 // pred_check_branch
      %750 = sbr.rel (0) target = $region29
    $region28: #{vector_quantizer_forward.1} parent=1 // pred_region
      _
    $region29: #{vector_quantizer_forward.1} parent=1 // pred_fallthru
      _
    // Predicated region
    $region30: #{vector_quantizer_forward.1} parent=1 // pred_check
      _
    $region31: #{vector_quantizer_forward.1} parent=1 // pred_check_branch
      %752 = sbr.rel (0) target = $region33
    $region32: #{vector_quantizer_forward.1} parent=1 // pred_region
      _
    $region33: #{vector_quantizer_forward.1} parent=1 // pred_fallthru
      _
    // Predicated region
    $region34: #{vector_quantizer_forward.1} parent=1 // pred_check
      _
    $region35: #{vector_quantizer_forward.1} parent=1 // pred_check_branch
      %754 = sbr.rel (0) target = $region37
    $region36: #{vector_quantizer_forward.1} parent=1 // pred_region
      _
    $region37: #{vector_quantizer_forward.1} parent=1 // pred_fallthru
      _
    // Predicated region
    $region38: #{vector_quantizer_forward.1} parent=1 // pred_check
      _
    $region39: #{vector_quantizer_forward.1} parent=1 // pred_check_branch
      %756 = sbr.rel (0) target = $region41
    $region40: #{vector_quantizer_forward.1} parent=1 // pred_region
      %758 = dma.done [#allocation3], 16
    $region41: #{vector_quantizer_forward.1} parent=1 // pred_fallthru
      _
    // Predicated region
    $region42: #{vector_quantizer_forward.1} parent=1 // pred_check
      _
    $region43: #{vector_quantizer_forward.1} parent=1 // pred_check_branch
      %760 = sbr.rel (0) target = $region45
    $region44: #{vector_quantizer_forward.1} parent=1 // pred_region
      _
    $region45: #{vector_quantizer_forward.1} parent=1 // pred_fallthru
      _
    %761 = vsyncpa [#allocation3], 1

</llo_original>
